<compile_context>
chip_gen: v7x
topology: tpu7x:2x2x1
jax: 0.10.0
libtpu: 0.0.40
codegen_flags: <defaults>
</compile_context>

<pallas_src>
import jax
import jax.numpy as jnp
from jax import lax
from jax.experimental import pallas as pl
from jax.experimental.pallas import tpu as pltpu
import numpy as np


def _make_conv_kernel(H, W, Cin, Cout):
    """Per-batch 3x3 same-conv on lane-folded layout via 3 banded matmuls."""
    WCout = W * Cout

    def kernel(x_ref, w_ref, b_ref, o_ref):
        # x_ref: (1, H+2, W*Cin)    compute-dtype input, H zero-padded by 1
        # w_ref: (3, W*Cin, W*Cout) banded weights (kx taps + W-boundary zeros)
        # b_ref: (1, W*Cout)        f32 bias tiled along W
        # o_ref: (1, H, W*Cout)     f32 lane-dense conv output
        acc = jnp.dot(x_ref[0, 0:H, :], w_ref[0],
                      preferred_element_type=jnp.float32)
        acc = acc + jnp.dot(x_ref[0, 1:H + 1, :], w_ref[1],
                            preferred_element_type=jnp.float32)
        acc = acc + jnp.dot(x_ref[0, 2:H + 2, :], w_ref[2],
                            preferred_element_type=jnp.float32)
        acc = acc + b_ref[...]                      # (1, WCout) broadcasts over H
        o_ref[...] = acc[None, :, :].astype(o_ref.dtype)

    return kernel


def _build_banded_weights(weight_oihw, W):
    """Fold kx taps + width zero-padding into banded matmul weights.

    Returns Wk of shape (3, W*Cin, W*Cout) with
      Wk[ky, w_in*Cin + ci, w*Cout + co] = weight[co, ci, ky, w_in - w + 1]
    when |w_in - w| <= 1 (valid 3x3 tap inside the row), else 0.
    """
    Cout, Cin, _, _ = weight_oihw.shape
    w_t = jnp.transpose(weight_oihw, (2, 3, 1, 0))        # (ky, kx, Cin, Cout)
    w_in = jnp.arange(W)[:, None]                          # (W, 1)
    w_out = jnp.arange(W)[None, :]                         # (1, W)
    kx = w_in - w_out + 1                                  # (W, W)
    valid = ((kx >= 0) & (kx <= 2)).astype(w_t.dtype)
    kx_c = jnp.clip(kx, 0, 2)
    banded = w_t[:, kx_c, :, :]                            # (3, Win, Wout, Cin, Cout)
    banded = banded * valid[None, :, :, None, None]
    banded = jnp.transpose(banded, (0, 1, 3, 2, 4))        # (3, Win, Cin, Wout, Cout)
    return banded.reshape(3, W * Cin, W * Cout)


def custom_conv_forward(x_nchw, weight_oihw, bias, stride,
                        compute_dtype=jnp.bfloat16):
    """CustomConv.forward for conv_type='conv', subnet=False (NCHW in/out)."""
    N, Cin, H, W = x_nchw.shape
    Cout = weight_oihw.shape[0]
    r = stride
    new_ngf = Cout // (r * r)
    WCin, WCout = W * Cin, W * Cout

    # --- glue: lane-fold input (W,Cin share lane axis), zero-pad H only ---
    x_lane = jnp.transpose(x_nchw, (0, 2, 3, 1)).reshape(N, H, WCin)
    x_lane = jnp.pad(x_lane, ((0, 0), (1, 1), (0, 0))).astype(compute_dtype)

    w_banded = _build_banded_weights(weight_oihw, W).astype(compute_dtype)
    b_row = jnp.tile(bias.astype(jnp.float32), W).reshape(1, WCout)

    flops = 2 * N * 3 * H * WCin * WCout
    bytes_accessed = (x_lane.size * x_lane.dtype.itemsize
                      + w_banded.size * w_banded.dtype.itemsize
                      + b_row.size * 4
                      + N * H * WCout * 4)

    conv_out = pl.pallas_call(
        _make_conv_kernel(H, W, Cin, Cout),
        out_shape=jax.ShapeDtypeStruct((N, H, WCout), jnp.float32),
        grid_spec=pltpu.PrefetchScalarGridSpec(
            num_scalar_prefetch=0,
            grid=(N,),
            in_specs=[
                pl.BlockSpec((1, H + 2, WCin), lambda n: (n, 0, 0)),
                pl.BlockSpec((3, WCin, WCout), lambda n: (0, 0, 0)),
                pl.BlockSpec((1, WCout), lambda n: (0, 0)),
            ],
            out_specs=pl.BlockSpec((1, H, WCout), lambda n: (n, 0, 0)),
        ),
        compiler_params=pltpu.CompilerParams(
            dimension_semantics=("parallel",)),
        cost_estimate=pl.CostEstimate(flops=flops, transcendentals=0,
                                      bytes_accessed=bytes_accessed),
    )(x_lane, w_banded, b_row)

    # --- glue: PixelShuffle(stride) + back to NCHW (single fused relayout) ---
    # conv_out[n, h, w*Cout + co] == conv[n, co, h, w]
    y = conv_out.reshape(N, H, W, new_ngf, r, r)           # co -> (c, i, j)
    y = jnp.transpose(y, (0, 3, 1, 4, 2, 5))               # (N, c, H, i, W, j)
    return y.reshape(N, new_ngf, H * r, W * r)


def reference_forward(x_nchw, weight_oihw, bias, stride,
                      compute_dtype=jnp.float32):
    """Pure-JAX reference: lax conv + pixel shuffle, same input rounding."""
    xc = x_nchw.astype(compute_dtype).astype(jnp.float32)
    wc = weight_oihw.astype(compute_dtype).astype(jnp.float32)
    conv = lax.conv_general_dilated(
        xc, wc, window_strides=(1, 1), padding=((1, 1), (1, 1)),
        dimension_numbers=("NCHW", "OIHW", "NCHW"),
        precision=lax.Precision.HIGHEST)
    conv = conv + bias.astype(jnp.float32).reshape(1, -1, 1, 1)
    N, Cout, H, W = conv.shape
    r = stride
    new_ngf = Cout // (r * r)
    y = conv.reshape(N, new_ngf, r, r, H, W)
    y = jnp.transpose(y, (0, 1, 4, 2, 5, 3))
    return y.reshape(N, new_ngf, H * r, W * r)


if __name__ == "__main__":
    # Small shapes consistent with the module: ngf=4, new_ngf=4, stride=2.
    N, ngf, H, W = 2, 4, 16, 16
    new_ngf, stride = 4, 2
    Cout = new_ngf * stride * stride  # 16

    key = jax.random.PRNGKey(0)
    k1, k2, k3 = jax.random.split(key, 3)
    x = jax.random.normal(k1, (N, ngf, H, W), dtype=jnp.float32)
    weight = jax.random.normal(k2, (Cout, ngf, 3, 3), dtype=jnp.float32) * 0.1
    bias = jax.random.normal(k3, (Cout,), dtype=jnp.float32) * 0.1

    # f32 path: matches the full-precision reference.
    out_f32 = jax.block_until_ready(
        custom_conv_forward(x, weight, bias, stride, compute_dtype=jnp.float32))
    ref_f32 = jax.block_until_ready(
        reference_forward(x, weight, bias, stride, compute_dtype=jnp.float32))
    assert out_f32.shape == (N, new_ngf, H * stride, W * stride), out_f32.shape
    np.testing.assert_allclose(np.asarray(out_f32), np.asarray(ref_f32),
                               rtol=1e-4, atol=1e-4)

    # bf16 path (recommended on v6e/v7x): compare against a reference with the
    # same bf16 input/weight rounding (accumulation stays f32 in both).
    out_bf16 = jax.block_until_ready(
        custom_conv_forward(x, weight, bias, stride, compute_dtype=jnp.bfloat16))
    ref_bf16 = jax.block_until_ready(
        reference_forward(x, weight, bias, stride, compute_dtype=jnp.bfloat16))
    np.testing.assert_allclose(np.asarray(out_bf16), np.asarray(ref_bf16),
                               rtol=1e-4, atol=1e-4)

    print("KERNEL_OK")
</pallas_src>

<mosaic_0001>
module attributes {stable_mosaic.version = 11 : i64} {
  func.func @kernel(%arg0: i32, %arg1: memref<1x18x64xf32, #tpu.memory_space<vmem>>, %arg2: memref<3x64x256xf32, #tpu.memory_space<vmem>>, %arg3: memref<1x256xf32, #tpu.memory_space<vmem>>, %arg4: memref<1x16x256xf32, #tpu.memory_space<vmem>>) attributes {dimension_semantics = [#tpu.dimension_semantics<parallel>], iteration_bounds = array<i64: 2>, scalar_prefetch = 0 : i64, scratch_operands = 0 : i64, tpu.core_type = #tpu.core_type<tc>, window_params = [{transform_indices = @transform_0, window_bounds = array<i64: 1, 18, 64>}, {pipeline_mode = #tpu.pipeline_mode<synchronous>, transform_indices = @transform_1, window_bounds = array<i64: 3, 64, 256>}, {pipeline_mode = #tpu.pipeline_mode<synchronous>, transform_indices = @transform_2, window_bounds = array<i64: 1, 256>}, {transform_indices = @transform_3, window_bounds = array<i64: 1, 16, 256>}]} {
    %c0 = arith.constant 0 : index
    %c0_0 = arith.constant 0 : index
    %c0_1 = arith.constant 0 : index
    %0 = vector.load %arg1[%c0, %c0_0, %c0_1] : memref<1x18x64xf32, #tpu.memory_space<vmem>>, vector<1x16x64xf32>
    %1 = vector.shape_cast %0 : vector<1x16x64xf32> to vector<16x64xf32>
    %c0_2 = arith.constant 0 : index
    %c0_3 = arith.constant 0 : index
    %c0_4 = arith.constant 0 : index
    %2 = vector.load %arg2[%c0_2, %c0_3, %c0_4] : memref<3x64x256xf32, #tpu.memory_space<vmem>>, vector<1x64x256xf32>
    %3 = vector.shape_cast %2 : vector<1x64x256xf32> to vector<64x256xf32>
    %cst = arith.constant dense<0.000000e+00> : vector<16x256xf32>
    %4 = tpu.matmul %1, %3, %cst {dimension_numbers = #tpu.dot_dimension_numbers<[1], [0], [0], [1], [0, 0, 1, 1], [], []>} : vector<16x64xf32>, vector<64x256xf32>, vector<16x256xf32> -> vector<16x256xf32>
    %c0_5 = arith.constant 0 : index
    %c1 = arith.constant 1 : index
    %c0_6 = arith.constant 0 : index
    %5 = vector.load %arg1[%c0_5, %c1, %c0_6] : memref<1x18x64xf32, #tpu.memory_space<vmem>>, vector<1x16x64xf32>
    %6 = vector.shape_cast %5 : vector<1x16x64xf32> to vector<16x64xf32>
    %c1_7 = arith.constant 1 : index
    %c0_8 = arith.constant 0 : index
    %c0_9 = arith.constant 0 : index
    %7 = vector.load %arg2[%c1_7, %c0_8, %c0_9] : memref<3x64x256xf32, #tpu.memory_space<vmem>>, vector<1x64x256xf32>
    %8 = vector.shape_cast %7 : vector<1x64x256xf32> to vector<64x256xf32>
    %cst_10 = arith.constant dense<0.000000e+00> : vector<16x256xf32>
    %9 = tpu.matmul %6, %8, %cst_10 {dimension_numbers = #tpu.dot_dimension_numbers<[1], [0], [0], [1], [0, 0, 1, 1], [], []>} : vector<16x64xf32>, vector<64x256xf32>, vector<16x256xf32> -> vector<16x256xf32>
    %10 = arith.addf %4, %9 : vector<16x256xf32>
    %c0_11 = arith.constant 0 : index
    %c2 = arith.constant 2 : index
    %c0_12 = arith.constant 0 : index
    %11 = vector.load %arg1[%c0_11, %c2, %c0_12] : memref<1x18x64xf32, #tpu.memory_space<vmem>>, vector<1x16x64xf32>
    %12 = vector.shape_cast %11 : vector<1x16x64xf32> to vector<16x64xf32>
    %c2_13 = arith.constant 2 : index
    %c0_14 = arith.constant 0 : index
    %c0_15 = arith.constant 0 : index
    %13 = vector.load %arg2[%c2_13, %c0_14, %c0_15] : memref<3x64x256xf32, #tpu.memory_space<vmem>>, vector<1x64x256xf32>
    %14 = vector.shape_cast %13 : vector<1x64x256xf32> to vector<64x256xf32>
    %cst_16 = arith.constant dense<0.000000e+00> : vector<16x256xf32>
    %15 = tpu.matmul %12, %14, %cst_16 {dimension_numbers = #tpu.dot_dimension_numbers<[1], [0], [0], [1], [0, 0, 1, 1], [], []>} : vector<16x64xf32>, vector<64x256xf32>, vector<16x256xf32> -> vector<16x256xf32>
    %16 = arith.addf %10, %15 : vector<16x256xf32>
    %c0_17 = arith.constant 0 : index
    %c0_18 = arith.constant 0 : index
    %17 = vector.load %arg3[%c0_17, %c0_18] : memref<1x256xf32, #tpu.memory_space<vmem>>, vector<1x256xf32>
    %18 = vector.broadcast %17 : vector<1x256xf32> to vector<16x256xf32>
    %19 = arith.addf %16, %18 : vector<16x256xf32>
    %20 = vector.shape_cast %19 : vector<16x256xf32> to vector<1x16x256xf32>
    %c0_19 = arith.constant 0 : index
    %c0_20 = arith.constant 0 : index
    %c0_21 = arith.constant 0 : index
    %21 = vector.load %arg4[%c0_19, %c0_20, %c0_21] : memref<1x16x256xf32, #tpu.memory_space<vmem>>, vector<1x16x256xf32>
    tpu.vector_store %arg4[%c0_19, %c0_20, %c0_21], %20 {strides = array<i32>} : memref<1x16x256xf32, #tpu.memory_space<vmem>>, vector<1x16x256xf32>,
    return
  }
  func.func @transform_0(%arg0: i32) -> (i32, i32, i32) {
    %c0_i32 = arith.constant 0 : i32
    %c0_i32_0 = arith.constant 0 : i32
    %c0_i32_1 = arith.constant 0 : i32
    return %arg0, %c0_i32, %c0_i32_0 : i32, i32, i32
  }
  func.func @transform_1(%arg0: i32) -> (i32, i32, i32) {
    %c0_i32 = arith.constant 0 : i32
    %c0_i32_0 = arith.constant 0 : i32
    %c0_i32_1 = arith.constant 0 : i32
    %c0_i32_2 = arith.constant 0 : i32
    return %c0_i32, %c0_i32_0, %c0_i32_1 : i32, i32, i32
  }
  func.func @transform_2(%arg0: i32) -> (i32, i32) {
    %c0_i32 = arith.constant 0 : i32
    %c0_i32_0 = arith.constant 0 : i32
    %c0_i32_1 = arith.constant 0 : i32
    return %c0_i32, %c0_i32_0 : i32, i32
  }
  func.func @transform_3(%arg0: i32) -> (i32, i32, i32) {
    %c0_i32 = arith.constant 0 : i32
    %c0_i32_0 = arith.constant 0 : i32
    %c0_i32_1 = arith.constant 0 : i32
    return %arg0, %c0_i32, %c0_i32_0 : i32, i32, i32
  }
}

</mosaic_0001>

<llo_original>
// kernel: tpu_custom_call.1
$region0: #{tpu_custom_call.1}
  #allocation0 [shape = 'u32[]', space=smem, size = 0x4, offset = 0x4, fixed_abs, tag = 'smem constant byte address 0x4 - core index']
  #allocation1 [shape = 'u32[144,128]{1,0:T(1,128)}', space=vmem, size = 0x12000, scoped, tag = 'internal scratch']
  %s0 = inlined_call_operand.vmem [shape: f32[2,18,64], index: 0, kind: input, shape index: {}]
  %s1 = inlined_call_operand.hbm [shape: f32[3,64,256], index: 1, kind: input, shape index: {}]
  %s2 = inlined_call_operand.vmem [shape: f32[1,256], index: 2, kind: input, shape index: {}]
  %s3 = inlined_call_operand.hbm [shape: f32[2,16,256], index: 3, kind: output, shape index: {}]
  %s4 = sld [smem:[#allocation0]]
  $region49: #{tpu_custom_call.1} parent=0
    _
  %s6 = ssub.s32 1, %s4
  %s7 = scalar_select 0, %s6, %s4
  $region1: #{tpu_custom_call.1} parent=0
    #allocation2 [shape = 'u8[196608]{0}', space=vmem, size = 0x30000, scoped, tag = 'input window, operand 1, single buffered']
    #allocation3 [shape = 's32[2]{0}', space=sflag, size = 0x8, scoped, tag = 'scoped memory for tpu_custom_call.1']
    #allocation4 [shape = 's32[2]{0}', space=sflag, size = 0x8, scoped, tag = 'scoped memory for tpu_custom_call.1']
    #allocation5 [shape = 'u8[32768]{0}', space=vmem, size = 0x8000, scoped, tag = 'output window, operand 0']
    %8 = vsyncpa [#allocation3], 0
    %9 = vsyncpa [#allocation4], 0
    %s10 = scalar_lea.sflag [#allocation4], 1
    %11 = vsyncpa %s10, 0
    loop: start=0, step=1, limit=4
    $region2: #{tpu_custom_call.1} parent=1 // loop_pre_header
      _
    $region3: #{tpu_custom_call.1} parent=1 // loop_header
      %s13 = sphi 0, %s17
      %p14 = scmp.ge.s32.totalorder %s13, 4
      %s23 = sphi 0, %s25
      %s26 = sphi 0, %s23
      %s27 = sphi 0, %s26
      %s43 = sphi 0, %s27
      %s47 = sphi 0, %s47
      %s49 = sphi 0, %s47
      %s50 = sphi 0, %s49
      %s64 = sphi 0, %s50
      %s68 = sphi 0, %s68
      %s70 = sphi 0, %s68
      %s71 = sphi 0, %s70
      %s85 = sphi 0, %s71
      %s91 = sphi 0, %s93
      %s94 = sphi 0, %s91
      %s95 = sphi 0, %s94
      %s111 = sphi 0, %s95
    $region4: #{tpu_custom_call.1} parent=1 // loop_header_branch
      %16 = sbr.rel (%p14) target = $region8
    $region5: #{tpu_custom_call.1} parent=1 // loop_body
      %s18 = ssub.s32 %s13, 1
      %s19 = ssub.s32 %s13, 2
      %s20 = sadd.s32 %s13, 1
      %s21 = ssub.s32 %s13, %s20
      %p22 = scmp.eq.s32.totalorder %s21, 0
      %s24 = sadd.s32 %s23, 1
      %s25 = scalar_select %p22, %s23, %s24
      %p28 = pneg %p22
      %p29 = scmp.eq.s32.totalorder %s13, 1
      %p30 = por %p28, %p29
      %p31 = scmp.ne.s32.totalorder %s23, %s26
      %p32 = scmp.eq.s32.totalorder %s13, 0
      %p33 = por %p31, %p32
      %p34 = scmp.ne.s32.totalorder %s23, %s26
      %p35 = scmp.eq.s32.totalorder %s18, 1
      %p36 = por %p34, %p35
      %p37 = scmp.ne.s32.totalorder %s26, %s27
      %p38 = scmp.eq.s32.totalorder %s18, 0
      %p39 = por %p37, %p38
      %p40 = scmp.ne.s32.totalorder %s26, %s27
      %p41 = scmp.eq.s32.totalorder %s19, 1
      %p42 = por %p40, %p41
      %p44 = scmp.ne.s32.totalorder %s27, %s43
      %p45 = scmp.eq.s32.totalorder %s19, 0
      %p46 = por %p44, %p45
      %s48 = sadd.s32 %s47, 1
      %p51 = scmp.eq.s32.totalorder %s13, 1
      %p52 = scmp.ne.s32.totalorder %s47, %s49
      %p53 = scmp.eq.s32.totalorder %s13, 0
      %p54 = por %p52, %p53
      %p55 = scmp.ne.s32.totalorder %s47, %s49
      %p56 = scmp.eq.s32.totalorder %s18, 1
      %p57 = por %p55, %p56
      %p58 = scmp.ne.s32.totalorder %s49, %s50
      %p59 = scmp.eq.s32.totalorder %s18, 0
      %p60 = por %p58, %p59
      %p61 = scmp.ne.s32.totalorder %s49, %s50
      %p62 = scmp.eq.s32.totalorder %s19, 1
      %p63 = por %p61, %p62
      %p65 = scmp.ne.s32.totalorder %s50, %s64
      %p66 = scmp.eq.s32.totalorder %s19, 0
      %p67 = por %p65, %p66
      %s69 = sadd.s32 %s68, 1
      %p72 = scmp.eq.s32.totalorder %s13, 1
      %p73 = scmp.ne.s32.totalorder %s68, %s70
      %p74 = scmp.eq.s32.totalorder %s13, 0
      %p75 = por %p73, %p74
      %p76 = scmp.ne.s32.totalorder %s68, %s70
      %p77 = scmp.eq.s32.totalorder %s18, 1
      %p78 = por %p76, %p77
      %p79 = scmp.ne.s32.totalorder %s70, %s71
      %p80 = scmp.eq.s32.totalorder %s18, 0
      %p81 = por %p79, %p80
      %p82 = scmp.ne.s32.totalorder %s70, %s71
      %p83 = scmp.eq.s32.totalorder %s19, 1
      %p84 = por %p82, %p83
      %p86 = scmp.ne.s32.totalorder %s71, %s85
      %p87 = scmp.eq.s32.totalorder %s19, 0
      %p88 = por %p86, %p87
      %s89 = ssub.s32 %s13, %s20
      %p90 = scmp.eq.s32.totalorder %s89, 0
      %s92 = sadd.s32 %s91, 1
      %s93 = scalar_select %p90, %s91, %s92
      %p96 = pneg %p90
      %p97 = scmp.eq.s32.totalorder %s13, 1
      %p98 = por %p96, %p97
      %p99 = scmp.ne.s32.totalorder %s91, %s94
      %p100 = scmp.eq.s32.totalorder %s13, 0
      %p101 = por %p99, %p100
      %p102 = scmp.ne.s32.totalorder %s91, %s94
      %p103 = scmp.eq.s32.totalorder %s18, 1
      %p104 = por %p102, %p103
      %p105 = scmp.ne.s32.totalorder %s94, %s95
      %p106 = scmp.eq.s32.totalorder %s18, 0
      %p107 = por %p105, %p106
      %p108 = scmp.ne.s32.totalorder %s94, %s95
      %p109 = scmp.eq.s32.totalorder %s19, 1
      %p110 = por %p108, %p109
      %p112 = scmp.ne.s32.totalorder %s95, %s111
      %p113 = scmp.eq.s32.totalorder %s19, 0
      %p114 = por %p112, %p113
      %p115 = scmp.le.s32.totalorder 1, %s13
      %p116 = scmp.lt.s32.totalorder %s13, 3
      %p117 = pnand %p115, %p116
      %p118 = pneg %p117
      // Predicated region
      $region9: #{tpu_custom_call.1} parent=5 // pred_check
        _
      $region10: #{tpu_custom_call.1} parent=5 // pred_check_branch
        %120 = sbr.rel (%p117) target = $region12
      $region11: #{tpu_custom_call.1} parent=5 // pred_region
        %s121 = ssub.s32 %s13, 1
        // Predicated region
        $region13: #{tpu_custom_call.1} parent=11 // pred_check
          %p122 = pneg %p60
        $region14: #{tpu_custom_call.1} parent=11 // pred_check_branch
          %124 = sbr.rel (%p122) target = $region16
        $region15: #{tpu_custom_call.1} parent=11 // pred_region
          %s126 = ssub.s32 6144, 6144
          %127 = vsyncadd [#allocation3], %s126
          %s128 = sshll.u32 [#allocation2], 4
          %s129 = int_to_ptr.vmem [resolvable:$true] %s128
          %134 = dma.hbm_to_vmem [thread:$0]  %s1, 6144, %s129, [#allocation3], 256, 256, 16
        $region16: #{tpu_custom_call.1} parent=11 // pred_fallthru
          _
        // Predicated region
        $region17: #{tpu_custom_call.1} parent=11 // pred_check
          %p135 = pneg %p81
        $region18: #{tpu_custom_call.1} parent=11 // pred_check_branch
          %137 = sbr.rel (%p135) target = $region20
        $region19: #{tpu_custom_call.1} parent=11 // pred_region
          _
        $region20: #{tpu_custom_call.1} parent=11 // pred_fallthru
          _
      $region12: #{tpu_custom_call.1} parent=5 // pred_fallthru
        _
      %p138 = scmp.lt.s32.totalorder %s13, 2
      // Predicated region
      $region21: #{tpu_custom_call.1} parent=5 // pred_check
        %p139 = pneg %p138
      $region22: #{tpu_custom_call.1} parent=5 // pred_check_branch
        %141 = sbr.rel (%p139) target = $region24
      $region23: #{tpu_custom_call.1} parent=5 // pred_region
        // Predicated region
        $region25: #{tpu_custom_call.1} parent=23 // pred_check
          %p142 = pneg %p33
        $region26: #{tpu_custom_call.1} parent=23 // pred_check_branch
          %144 = sbr.rel (%p142) target = $region28
        $region27: #{tpu_custom_call.1} parent=23 // pred_region
          %p145 = scmp.lt.s32.totalorder %s13, 1
          %s146 = scalar_select %p145, %s13, 1
          %s147 = smul.addr %s146, 3
          %s148 = smul.addr %s147, 8
          %s149 = scalar_lea.vmem %s0, %s148
        $region28: #{tpu_custom_call.1} parent=23 // pred_fallthru
          _
      $region24: #{tpu_custom_call.1} parent=5 // pred_fallthru
        _
      %p150 = scmp.le.s32.totalorder 1, %s13
      %p151 = scmp.lt.s32.totalorder %s13, 3
      %p152 = pnand %p150, %p151
      %p153 = pneg %p152
      // Predicated region
      $region29: #{tpu_custom_call.1} parent=5 // pred_check
        _
      $region30: #{tpu_custom_call.1} parent=5 // pred_check_branch
        %155 = sbr.rel (%p152) target = $region32
      $region31: #{tpu_custom_call.1} parent=5 // pred_region
        %s156 = ssub.s32 %s13, 1
        // Predicated region
        $region33: #{tpu_custom_call.1} parent=31 // pred_check
          %p157 = pneg %p60
        $region34: #{tpu_custom_call.1} parent=31 // pred_check_branch
          %159 = sbr.rel (%p157) target = $region36
        $region35: #{tpu_custom_call.1} parent=31 // pred_region
          %160 = dma.done [#allocation3], 6144
        $region36: #{tpu_custom_call.1} parent=31 // pred_fallthru
          _
        %p161 = scmp.lt.s32.totalorder %s18, 1
        %s162 = scalar_select %p161, %s18, 1
        %s163 = smul.addr %s162, 3
        %s164 = smul.addr %s163, 8
        %s165 = scalar_lea.vmem %s0, %s164
        %p166 = pneg %p39
        %p167 = pneg %p36
        %p168 = pneg %p60
        %p169 = pneg %p57
        %p170 = pneg %p81
        %p171 = pneg %p78
        %p172 = pneg %p107
        %p173 = pneg %p104
        %s174 = sand.u32 %s94, 1
        %s175 = scalar_lea.sflag [#allocation4], %s174
        %s176 = sand.u32 %s94, 1
        %s177 = smul.addr %s176, 32
        %s178 = scalar_lea.vmem [#allocation5], %s177
        %p179 = scmp.lt.s32.totalorder %s18, 1
        %s180 = scalar_select %p179, %s18, 1
        %s181 = smul.addr %s180, 3
        %s182 = smul.addr %s181, 8
        %s183 = scalar_lea.vmem %s0, %s182
        %v184 = vld [vmem:[%s183] sm:$0xff]
        %v185 = vld [vmem:[%s183 + $0x8] sm:$0xff]
        %v186 = vld [vmem:[#allocation2] sm:$0xff]
        %v187 = vld [vmem:[#allocation2 + $0x8] sm:$0xff]
        %v188 = vld [vmem:[#allocation2 + $0x10] sm:$0xff]
        %v189 = vld [vmem:[#allocation2 + $0x18] sm:$0xff]
        %v190 = vld [vmem:[#allocation2 + $0x20] sm:$0xff]
        %v191 = vld [vmem:[#allocation2 + $0x28] sm:$0xff]
        %v192 = vld [vmem:[#allocation2 + $0x30] sm:$0xff]
        %v193 = vld [vmem:[#allocation2 + $0x38] sm:$0xff]
        %v194 = vld [vmem:[#allocation2 + $0x40] sm:$0xff]
        %v195 = vld [vmem:[#allocation2 + $0x48] sm:$0xff]
        %v196 = vld [vmem:[#allocation2 + $0x50] sm:$0xff]
        %v197 = vld [vmem:[#allocation2 + $0x58] sm:$0xff]
        %v198 = vld [vmem:[#allocation2 + $0x60] sm:$0xff]
        %v199 = vld [vmem:[#allocation2 + $0x68] sm:$0xff]
        %v200 = vld [vmem:[#allocation2 + $0x70] sm:$0xff]
        %v201 = vld [vmem:[#allocation2 + $0x78] sm:$0xff]
        %v202 = vld [vmem:[%s183 + $0x1] sm:$0xff]
        %v203 = vld [vmem:[%s183 + $0x9] sm:$0xff]
        %s204 = scalar_lea.vmem [#allocation2], 128
        %v205 = vld [vmem:[%s204] sm:$0xff]
        %v206 = vld [vmem:[%s204 + $0x8] sm:$0xff]
        %v207 = vld [vmem:[%s204 + $0x10] sm:$0xff]
        %v208 = vld [vmem:[%s204 + $0x18] sm:$0xff]
        %v209 = vld [vmem:[%s204 + $0x20] sm:$0xff]
        %v210 = vld [vmem:[%s204 + $0x28] sm:$0xff]
        %v211 = vld [vmem:[%s204 + $0x30] sm:$0xff]
        %v212 = vld [vmem:[%s204 + $0x38] sm:$0xff]
        %v213 = vld [vmem:[%s204 + $0x40] sm:$0xff]
        %v214 = vld [vmem:[%s204 + $0x48] sm:$0xff]
        %v215 = vld [vmem:[%s204 + $0x50] sm:$0xff]
        %v216 = vld [vmem:[%s204 + $0x58] sm:$0xff]
        %v217 = vld [vmem:[%s204 + $0x60] sm:$0xff]
        %v218 = vld [vmem:[%s204 + $0x68] sm:$0xff]
        %v219 = vld [vmem:[%s204 + $0x70] sm:$0xff]
        %v220 = vld [vmem:[%s204 + $0x78] sm:$0xff]
        %vm221 = vcmask 523264
        %v223 = vsel %vm221, %v202, 0
        %v226 = vsel %vm221, %v203, 0
        %228 = vmatprep.subr.mxu0 %v206
        %229 = vmatpush1.msra.mxu0 %v205
        %230 = vmatprep.subr.mxu0 %v208
        %231 = vmatpush1.msra.mxu0 %v207
        %232 = vmatprep.subr.mxu0 %v210
        %233 = vmatpush1.msra.mxu0 %v209
        %234 = vmatprep.subr.mxu0 %v212
        %235 = vmatpush1.msra.mxu0 %v211
        %236 = vmatprep.subr.mxu0 %v214
        %237 = vmatpush1.msra.mxu0 %v213
        %238 = vmatprep.subr.mxu0 %v216
        %239 = vmatpush1.msra.mxu0 %v215
        %240 = vmatprep.subr.mxu0 %v218
        %241 = vmatpush1.msra.mxu0 %v217
        %242 = vmatprep.subr.mxu0 %v220
        %243 = vmatpush1.msra.mxu0 %v219
        %244 = vmatprep.subr.mxu0 0.0
        %245 = vmatpush1.msra.mxu0 0.0
        %246 = vmatprep.subr.mxu0 0.0
        %247 = vmatpush1.msra.mxu0 0.0
        %248 = vmatprep.subr.mxu0 0.0
        %249 = vmatpush1.msra.mxu0 0.0
        %250 = vmatprep.subr.mxu0 0.0
        %251 = vmatpush1.msra.mxu0 0.0
        %252 = vmatprep.subr.mxu0 0.0
        %253 = vmatpush1.msra.mxu0 0.0
        %254 = vmatprep.subr.mxu0 0.0
        %255 = vmatpush1.msra.mxu0 0.0
        %256 = vmatprep.subr.mxu0 0.0
        %257 = vmatpush1.msra.mxu0 0.0
        %258 = vmatprep.subr.mxu0 0.0
        %259 = vmatpush1.msra.mxu0 0.0
        %260 = vmatprep.subr.mxu0 0.0
        %261 = vmatpush1.msra.mxu0 0.0
        %262 = vmatprep.subr.mxu0 0.0
        %263 = vmatpush1.msra.mxu0 0.0
        %264 = vmatprep.subr.mxu0 0.0
        %265 = vmatpush1.msra.mxu0 0.0
        %266 = vmatprep.subr.mxu0 0.0
        %267 = vmatpush1.msra.mxu0 0.0
        %268 = vmatprep.subr.mxu0 0.0
        %269 = vmatpush1.msra.mxu0 0.0
        %270 = vmatprep.subr.mxu0 0.0
        %271 = vmatpush1.msra.mxu0 0.0
        %272 = vmatprep.subr.mxu0 0.0
        %273 = vmatpush1.msra.mxu0 0.0
        %274 = vmatprep.subr.mxu0 0.0
        %275 = vmatpush1.msra.mxu0 0.0
        %276 = vmatprep.subr.mxu0 0.0
        %277 = vmatpush1.msra.mxu0 0.0
        %278 = vmatprep.subr.mxu0 0.0
        %279 = vmatpush1.msra.mxu0 0.0
        %280 = vmatprep.subr.mxu0 0.0
        %281 = vmatpush1.msra.mxu0 0.0
        %282 = vmatprep.subr.mxu0 0.0
        %283 = vmatpush1.msra.mxu0 0.0
        %284 = vmatprep.subr.mxu0 0.0
        %285 = vmatpush1.msra.mxu0 0.0
        %286 = vmatprep.subr.mxu0 0.0
        %287 = vmatpush1.msra.mxu0 0.0
        %288 = vmatprep.subr.mxu0 0.0
        %289 = vmatpush1.msra.mxu0 0.0
        %290 = vmatprep.subr.mxu0 0.0
        %291 = vmatpush1.msra.mxu0 0.0
        %292 = vmatprep.mubr.f32.mxu0 0.0
        %293 = vmatmul.mubr.f32.gmra.mrb[0].mxu0 %v223
        %v294 = vpop.f32.mrb[0].mxu0
        %v295 = vadd.f32 0.0, %v294
        %v296 = vpop.f32.mrb[0].mxu0
        %v297 = vadd.f32 0.0, %v296
        %298 = vmatprep.mubr.f32.mxu0 0.0
        %299 = vmatmul.mubr.f32.gmra.mrb[0].mxu0 %v226
        %v300 = vpop.f32.mrb[0].mxu0
        %v301 = vadd.f32 0.0, %v300
        %v302 = vpop.f32.mrb[0].mxu0
        %v303 = vadd.f32 0.0, %v302
        %304 = vdwg.mxu0
        %v306 = vsel %vm221, %v184, 0
        %v309 = vsel %vm221, %v185, 0
        %311 = vmatprep.subr.mxu0 %v187
        %312 = vmatpush1.msra.mxu0 %v186
        %313 = vmatprep.subr.mxu0 %v189
        %314 = vmatpush1.msra.mxu0 %v188
        %315 = vmatprep.subr.mxu0 %v191
        %316 = vmatpush1.msra.mxu0 %v190
        %317 = vmatprep.subr.mxu0 %v193
        %318 = vmatpush1.msra.mxu0 %v192
        %319 = vmatprep.subr.mxu0 %v195
        %320 = vmatpush1.msra.mxu0 %v194
        %321 = vmatprep.subr.mxu0 %v197
        %322 = vmatpush1.msra.mxu0 %v196
        %323 = vmatprep.subr.mxu0 %v199
        %324 = vmatpush1.msra.mxu0 %v198
        %325 = vmatprep.subr.mxu0 %v201
        %326 = vmatpush1.msra.mxu0 %v200
        %327 = vmatprep.subr.mxu0 0.0
        %328 = vmatpush1.msra.mxu0 0.0
        %329 = vmatprep.subr.mxu0 0.0
        %330 = vmatpush1.msra.mxu0 0.0
        %331 = vmatprep.subr.mxu0 0.0
        %332 = vmatpush1.msra.mxu0 0.0
        %333 = vmatprep.subr.mxu0 0.0
        %334 = vmatpush1.msra.mxu0 0.0
        %335 = vmatprep.subr.mxu0 0.0
        %336 = vmatpush1.msra.mxu0 0.0
        %337 = vmatprep.subr.mxu0 0.0
        %338 = vmatpush1.msra.mxu0 0.0
        %339 = vmatprep.subr.mxu0 0.0
        %340 = vmatpush1.msra.mxu0 0.0
        %341 = vmatprep.subr.mxu0 0.0
        %342 = vmatpush1.msra.mxu0 0.0
        %343 = vmatprep.subr.mxu0 0.0
        %344 = vmatpush1.msra.mxu0 0.0
        %345 = vmatprep.subr.mxu0 0.0
        %346 = vmatpush1.msra.mxu0 0.0
        %347 = vmatprep.subr.mxu0 0.0
        %348 = vmatpush1.msra.mxu0 0.0
        %349 = vmatprep.subr.mxu0 0.0
        %350 = vmatpush1.msra.mxu0 0.0
        %351 = vmatprep.subr.mxu0 0.0
        %352 = vmatpush1.msra.mxu0 0.0
        %353 = vmatprep.subr.mxu0 0.0
        %354 = vmatpush1.msra.mxu0 0.0
        %355 = vmatprep.subr.mxu0 0.0
        %356 = vmatpush1.msra.mxu0 0.0
        %357 = vmatprep.subr.mxu0 0.0
        %358 = vmatpush1.msra.mxu0 0.0
        %359 = vmatprep.subr.mxu0 0.0
        %360 = vmatpush1.msra.mxu0 0.0
        %361 = vmatprep.subr.mxu0 0.0
        %362 = vmatpush1.msra.mxu0 0.0
        %363 = vmatprep.subr.mxu0 0.0
        %364 = vmatpush1.msra.mxu0 0.0
        %365 = vmatprep.subr.mxu0 0.0
        %366 = vmatpush1.msra.mxu0 0.0
        %367 = vmatprep.subr.mxu0 0.0
        %368 = vmatpush1.msra.mxu0 0.0
        %369 = vmatprep.subr.mxu0 0.0
        %370 = vmatpush1.msra.mxu0 0.0
        %371 = vmatprep.subr.mxu0 0.0
        %372 = vmatpush1.msra.mxu0 0.0
        %373 = vmatprep.subr.mxu0 0.0
        %374 = vmatpush1.msra.mxu0 0.0
        %375 = vmatprep.mubr.f32.mxu0 0.0
        %376 = vmatmul.mubr.f32.gmra.mrb[0].mxu0 %v306
        %v377 = vpop.f32.mrb[0].mxu0
        %v378 = vadd.f32 %v295, %v377
        %v379 = vpop.f32.mrb[0].mxu0
        %v380 = vadd.f32 %v297, %v379
        %381 = vmatprep.mubr.f32.mxu0 0.0
        %382 = vmatmul.mubr.f32.gmra.mrb[0].mxu0 %v309
        %v383 = vpop.f32.mrb[0].mxu0
        %v384 = vadd.f32 %v301, %v383
        %v385 = vpop.f32.mrb[0].mxu0
        %v386 = vadd.f32 %v303, %v385
        %387 = vdwg.mxu0
        %v388 = vld [vmem:[%s183 + $0x2] sm:$0xff]
        %v389 = vld [vmem:[%s183 + $0xa] sm:$0xff]
        %s390 = scalar_lea.vmem [#allocation2], 256
        %v391 = vld [vmem:[%s390] sm:$0xff]
        %v392 = vld [vmem:[%s390 + $0x8] sm:$0xff]
        %v393 = vld [vmem:[%s390 + $0x10] sm:$0xff]
        %v394 = vld [vmem:[%s390 + $0x18] sm:$0xff]
        %v395 = vld [vmem:[%s390 + $0x20] sm:$0xff]
        %v396 = vld [vmem:[%s390 + $0x28] sm:$0xff]
        %v397 = vld [vmem:[%s390 + $0x30] sm:$0xff]
        %v398 = vld [vmem:[%s390 + $0x38] sm:$0xff]
        %v399 = vld [vmem:[%s390 + $0x40] sm:$0xff]
        %v400 = vld [vmem:[%s390 + $0x48] sm:$0xff]
        %v401 = vld [vmem:[%s390 + $0x50] sm:$0xff]
        %v402 = vld [vmem:[%s390 + $0x58] sm:$0xff]
        %v403 = vld [vmem:[%s390 + $0x60] sm:$0xff]
        %v404 = vld [vmem:[%s390 + $0x68] sm:$0xff]
        %v405 = vld [vmem:[%s390 + $0x70] sm:$0xff]
        %v406 = vld [vmem:[%s390 + $0x78] sm:$0xff]
        %v408 = vsel %vm221, %v388, 0
        %v411 = vsel %vm221, %v389, 0
        %413 = vmatprep.subr.mxu0 %v392
        %414 = vmatpush1.msra.mxu0 %v391
        %415 = vmatprep.subr.mxu0 %v394
        %416 = vmatpush1.msra.mxu0 %v393
        %417 = vmatprep.subr.mxu0 %v396
        %418 = vmatpush1.msra.mxu0 %v395
        %419 = vmatprep.subr.mxu0 %v398
        %420 = vmatpush1.msra.mxu0 %v397
        %421 = vmatprep.subr.mxu0 %v400
        %422 = vmatpush1.msra.mxu0 %v399
        %423 = vmatprep.subr.mxu0 %v402
        %424 = vmatpush1.msra.mxu0 %v401
        %425 = vmatprep.subr.mxu0 %v404
        %426 = vmatpush1.msra.mxu0 %v403
        %427 = vmatprep.subr.mxu0 %v406
        %428 = vmatpush1.msra.mxu0 %v405
        %429 = vmatprep.subr.mxu0 0.0
        %430 = vmatpush1.msra.mxu0 0.0
        %431 = vmatprep.subr.mxu0 0.0
        %432 = vmatpush1.msra.mxu0 0.0
        %433 = vmatprep.subr.mxu0 0.0
        %434 = vmatpush1.msra.mxu0 0.0
        %435 = vmatprep.subr.mxu0 0.0
        %436 = vmatpush1.msra.mxu0 0.0
        %437 = vmatprep.subr.mxu0 0.0
        %438 = vmatpush1.msra.mxu0 0.0
        %439 = vmatprep.subr.mxu0 0.0
        %440 = vmatpush1.msra.mxu0 0.0
        %441 = vmatprep.subr.mxu0 0.0
        %442 = vmatpush1.msra.mxu0 0.0
        %443 = vmatprep.subr.mxu0 0.0
        %444 = vmatpush1.msra.mxu0 0.0
        %445 = vmatprep.subr.mxu0 0.0
        %446 = vmatpush1.msra.mxu0 0.0
        %447 = vmatprep.subr.mxu0 0.0
        %448 = vmatpush1.msra.mxu0 0.0
        %449 = vmatprep.subr.mxu0 0.0
        %450 = vmatpush1.msra.mxu0 0.0
        %451 = vmatprep.subr.mxu0 0.0
        %452 = vmatpush1.msra.mxu0 0.0
        %453 = vmatprep.subr.mxu0 0.0
        %454 = vmatpush1.msra.mxu0 0.0
        %455 = vmatprep.subr.mxu0 0.0
        %456 = vmatpush1.msra.mxu0 0.0
        %457 = vmatprep.subr.mxu0 0.0
        %458 = vmatpush1.msra.mxu0 0.0
        %459 = vmatprep.subr.mxu0 0.0
        %460 = vmatpush1.msra.mxu0 0.0
        %461 = vmatprep.subr.mxu0 0.0
        %462 = vmatpush1.msra.mxu0 0.0
        %463 = vmatprep.subr.mxu0 0.0
        %464 = vmatpush1.msra.mxu0 0.0
        %465 = vmatprep.subr.mxu0 0.0
        %466 = vmatpush1.msra.mxu0 0.0
        %467 = vmatprep.subr.mxu0 0.0
        %468 = vmatpush1.msra.mxu0 0.0
        %469 = vmatprep.subr.mxu0 0.0
        %470 = vmatpush1.msra.mxu0 0.0
        %471 = vmatprep.subr.mxu0 0.0
        %472 = vmatpush1.msra.mxu0 0.0
        %473 = vmatprep.subr.mxu0 0.0
        %474 = vmatpush1.msra.mxu0 0.0
        %475 = vmatprep.subr.mxu0 0.0
        %476 = vmatpush1.msra.mxu0 0.0
        %477 = vmatprep.mubr.f32.mxu0 0.0
        %478 = vmatmul.mubr.f32.gmra.mrb[0].mxu0 %v408
        %v479 = vpop.f32.mrb[0].mxu0
        %v480 = vadd.f32 0.0, %v479
        %v481 = vpop.f32.mrb[0].mxu0
        %v482 = vadd.f32 0.0, %v481
        %483 = vmatprep.mubr.f32.mxu0 0.0
        %484 = vmatmul.mubr.f32.gmra.mrb[0].mxu0 %v411
        %v485 = vpop.f32.mrb[0].mxu0
        %v486 = vadd.f32 0.0, %v485
        %v487 = vpop.f32.mrb[0].mxu0
        %v488 = vadd.f32 0.0, %v487
        %489 = vdwg.mxu0
        %v490 = vadd.f32 %v378, %v480
        %v491 = vadd.f32 %v380, %v482
        %v492 = vadd.f32 %v384, %v486
        %v493 = vadd.f32 %v386, %v488
        %v494 = vld [vmem:[%s2] sm:$0x3]
        %v496 = vlaneseq
        %v497 = vshrl.u32 %v496, 7
        %v498 = vsub.s32 0, %v497
        %v499 = vrot.slane %v494, %v498
        %v500 = vlaneseq
        %v501 = vshrl.u32 %v500, 7
        %v502 = vsub.s32 1, %v501
        %v503 = vrot.slane %v494, %v502
        %v506 = vadd.f32 %v490, %v499
        %v507 = vadd.f32 %v491, %v503
        %v508 = vadd.f32 %v492, %v499
        %v509 = vadd.f32 %v493, %v503
        %510 = vst [vmem:[%s178] sm:$0xff] %v506
        %511 = vst [vmem:[%s178 + $0x8] sm:$0xff] %v507
        %512 = vst [vmem:[%s178 + $0x10] sm:$0xff] %v508
        %513 = vst [vmem:[%s178 + $0x18] sm:$0xff] %v509
        %s514 = sand.u32 %s94, 1
        %s515 = scalar_lea.sflag [#allocation4], %s514
        %s516 = sand.u32 %s94, 1
        %s517 = smul.addr %s516, 32
        %s518 = scalar_lea.vmem [#allocation5], %s517
        // Predicated region
        $region37: #{tpu_custom_call.1} parent=31 // pred_check
          %p519 = pneg %p104
        $region38: #{tpu_custom_call.1} parent=31 // pred_check_branch
          %521 = sbr.rel (%p519) target = $region40
        $region39: #{tpu_custom_call.1} parent=31 // pred_region
          %s523 = ssub.s32 512, 512
          %524 = vsyncadd %s515, %s523
          %s525 = smul.addr %s18, 4
          %s526 = smul.addr %s525, 128
          %s527 = scalar_lea.hbm %s3, %s526
          %s528 = sshll.u32 %s518, 4
          %s529 = int_to_ptr.vmem [resolvable:$true] %s528
          %534 = dma.vmem_to_hbm [thread:$0]  %s529, 512, %s527, %s515, 256, 256, 16
        $region40: #{tpu_custom_call.1} parent=31 // pred_fallthru
          _
      $region32: #{tpu_custom_call.1} parent=5 // pred_fallthru
        _
      %p535 = scmp.le.s32.totalorder 2, %s13
      // Predicated region
      $region41: #{tpu_custom_call.1} parent=5 // pred_check
        %p536 = pneg %p535
      $region42: #{tpu_custom_call.1} parent=5 // pred_check_branch
        %538 = sbr.rel (%p536) target = $region44
      $region43: #{tpu_custom_call.1} parent=5 // pred_region
        %s539 = ssub.s32 %s13, 2
        // Predicated region
        $region45: #{tpu_custom_call.1} parent=43 // pred_check
          %p540 = pneg %p110
        $region46: #{tpu_custom_call.1} parent=43 // pred_check_branch
          %542 = sbr.rel (%p540) target = $region48
        $region47: #{tpu_custom_call.1} parent=43 // pred_region
          %s543 = sand.u32 %s95, 1
          %s544 = scalar_lea.sflag [#allocation4], %s543
          %s545 = sand.u32 %s95, 1
          %s546 = smul.addr %s545, 32
          %s547 = scalar_lea.vmem [#allocation5], %s546
          %548 = dma.done %s544, 512
        $region48: #{tpu_custom_call.1} parent=43 // pred_fallthru
          _
      $region44: #{tpu_custom_call.1} parent=5 // pred_fallthru
        _
    $region6: #{tpu_custom_call.1} parent=1 // loop_footer
      %s17 = sadd.s32 1, %s13
    $region7: #{tpu_custom_call.1} parent=1 // loop_footer_branch
      %12 = sbr.rel target = $region3
    $region8: #{tpu_custom_call.1} parent=1 // loop_exit
      _
    %549 = vsyncpa [#allocation3], 1
    %s550 = scalar_lea.sflag [#allocation3], 1
    %551 = vsyncpa %s550, 1
    %552 = vsyncpa [#allocation4], 1
    %s553 = scalar_lea.sflag [#allocation4], 1
    %554 = vsyncpa %s553, 1

</llo_original>
